<compile_context>
chip_gen: v6e
topology: v6e:2x2x1
jax: 0.10.0
libtpu: 0.0.40
codegen_flags: <defaults>
</compile_context>

<pallas_src>
import functools

import jax
import jax.numpy as jnp
from jax.experimental import pallas as pl
from jax.experimental.pallas import tpu as pltpu

LANE = 128


def _disc_sums_kernel(real_ref, fake_ref, sum_r_ref, sum_f_ref,
                      acc_r_ref, acc_f_ref, *, fold, needs_mask,
                      valid_rows_last):
    """Grid axis 0 is a sequential reduction over row-tiles ('arbitrary').

    Emits raw sums: sum((real - 1)^2) and sum(fake^2) over the slab.
    """
    i = pl.program_id(0)
    last = pl.num_programs(0) - 1

    @pl.when(i == 0)
    def _init():
        acc_r_ref[...] = jnp.zeros_like(acc_r_ref)
        acc_f_ref[...] = jnp.zeros_like(acc_f_ref)

    def _accumulate(mask_rows):
        r = real_ref[...].astype(jnp.float32)
        f = fake_ref[...].astype(jnp.float32)
        dr = r - 1.0
        sq_r = dr * dr          # (pred_real - 1)^2
        sq_f = f * f            # pred_fake^2
        if mask_rows is not None:
            # Only the partial last block needs this; whole rows are
            # valid/invalid, so a sublane-index compare suffices.
            row = jax.lax.broadcasted_iota(jnp.int32, sq_r.shape, 0)
            keep = row < mask_rows
            sq_r = jnp.where(keep, sq_r, 0.0)
            sq_f = jnp.where(keep, sq_f, 0.0)
        if fold:
            # Layout-preserving fold to one vreg: pure VPU adds, single
            # accumulator load/store per step.
            rows = sq_r.shape[0]
            sq_r = sq_r.reshape(rows // 8, 8, LANE).sum(axis=0)
            sq_f = sq_f.reshape(rows // 8, 8, LANE).sum(axis=0)
        acc_r_ref[...] += sq_r
        acc_f_ref[...] += sq_f

    if needs_mask:
        @pl.when(i != last)
        def _fast_path():
            _accumulate(None)

        @pl.when(i == last)
        def _masked_last():
            _accumulate(valid_rows_last)
    else:
        _accumulate(None)

    @pl.when(i == last)
    def _finalize():
        sum_r_ref[0, 0] = jnp.sum(acc_r_ref[...])
        sum_f_ref[0, 0] = jnp.sum(acc_f_ref[...])


def _pick_tile(n_rows, tm_f32_rows, itemsize):
    """Dtype-aware, VMEM-budgeted row-tile selection."""
    # Sublane packing: f32 -> 8-row tiles, bf16 -> 16, int8/fp8 -> 32.
    row_align = 8 * max(1, 4 // itemsize)
    tm_rows = (int(tm_f32_rows) * 4) // itemsize
    # 2 inputs x 2 pipeline buffers x tm_rows x 128 x itemsize <= ~12 MiB:
    # safely under v5e's 16 MiB default scoped VMEM (v6e/v7x have 32 MiB).
    budget = 12 * 1024 * 1024
    tm_rows = min(tm_rows, budget // (4 * LANE * itemsize))
    tm_rows = max(row_align, (tm_rows // row_align) * row_align)

    if n_rows <= tm_rows:
        return n_rows, 1, False, n_rows      # single block == full slab
    steps = -(-n_rows // tm_rows)            # cdiv
    valid_last = n_rows - (steps - 1) * tm_rows
    return tm_rows, steps, valid_last != tm_rows, valid_last


def discriminator_loss(pred_real, pred_fake, lam=1.0, return_all=False,
                       tm=4096):
    assert pred_real.shape == pred_fake.shape, "kernel assumes matching shapes"
    n = int(pred_real.size)
    n_rows = n // LANE
    tail_len = n - n_rows * LANE

    flat_r = pred_real.reshape(-1)
    flat_f = pred_fake.reshape(-1)

    # <=127-element remainder handled in plain JAX (avoids a full pad copy of
    # each input and any in-kernel lane mask).
    if tail_len:
        tr = flat_r[n_rows * LANE:].astype(jnp.float32)
        tf = flat_f[n_rows * LANE:].astype(jnp.float32)
        sum_r_tail = jnp.sum((tr - 1.0) ** 2)
        sum_f_tail = jnp.sum(tf * tf)
    else:
        sum_r_tail = jnp.zeros((), jnp.float32)
        sum_f_tail = jnp.zeros((), jnp.float32)

    if n_rows == 0:
        # Tiny input (< 128 elements): nothing for the kernel to do.
        sum_r, sum_f = sum_r_tail, sum_f_tail
    else:
        real2d = (flat_r if tail_len == 0
                  else flat_r[: n_rows * LANE]).reshape(n_rows, LANE)
        fake2d = (flat_f if tail_len == 0
                  else flat_f[: n_rows * LANE]).reshape(n_rows, LANE)

        itemsize = max(real2d.dtype.itemsize, fake2d.dtype.itemsize)
        tm_eff, steps, needs_mask, valid_rows_last = _pick_tile(
            n_rows, tm, itemsize)

        fold = (tm_eff % 8 == 0)
        acc_rows = 8 if fold else tm_eff

        kernel = functools.partial(_disc_sums_kernel, fold=fold,
                                   needs_mask=needs_mask,
                                   valid_rows_last=valid_rows_last)
        scalar_out = jax.ShapeDtypeStruct((1, 1), jnp.float32)
        smem_spec = pl.BlockSpec(memory_space=pltpu.SMEM)

        sum_r_k, sum_f_k = pl.pallas_call(
            kernel,
            out_shape=(scalar_out, scalar_out),
            grid_spec=pltpu.PrefetchScalarGridSpec(
                num_scalar_prefetch=0,
                grid=(steps,),
                in_specs=[pl.BlockSpec((tm_eff, LANE), lambda i: (i, 0)),
                          pl.BlockSpec((tm_eff, LANE), lambda i: (i, 0))],
                out_specs=(smem_spec, smem_spec),
                scratch_shapes=[pltpu.VMEM((acc_rows, LANE), jnp.float32),
                                pltpu.VMEM((acc_rows, LANE), jnp.float32)],
            ),
            compiler_params=pltpu.CompilerParams(
                dimension_semantics=("arbitrary",)),
        )(real2d, fake2d)

        sum_r = sum_r_k[0, 0] + sum_r_tail
        sum_f = sum_f_k[0, 0] + sum_f_tail

    inv_n = jnp.float32(1.0 / n)
    loss_real = sum_r * inv_n
    loss_fake = sum_f * inv_n
    loss = jnp.float32(lam) * loss_real + loss_fake
    if return_all:
        return loss, loss_real, loss_fake
    return loss


if __name__ == "__main__":
    key = jax.random.PRNGKey(0)
    k1, k2, k3, k4 = jax.random.split(key, 4)

    # Discriminator patch predictions for real / fake images (NCHW).
    pred_real = jax.random.normal(k1, (2, 4, 16, 16), dtype=jnp.float32)
    pred_fake = jax.random.normal(k2, (2, 4, 16, 16), dtype=jnp.float32)

    loss = discriminator_loss(pred_real, pred_fake, lam=1.0)
    loss = jax.block_until_ready(loss)
    ref = jnp.mean((pred_real - 1.0) ** 2) + jnp.mean(pred_fake ** 2)
    assert jnp.allclose(loss, ref, rtol=1e-5, atol=1e-5), (loss, ref)

    # return_all path with a non-default lambda.
    l, lr_, lf_ = discriminator_loss(pred_real, pred_fake, lam=2.0,
                                     return_all=True)
    jax.block_until_ready((l, lr_, lf_))
    assert jnp.allclose(lr_, jnp.mean((pred_real - 1.0) ** 2),
                        rtol=1e-5, atol=1e-5)
    assert jnp.allclose(lf_, jnp.mean(pred_fake ** 2), rtol=1e-5, atol=1e-5)
    assert jnp.allclose(l, 2.0 * lr_ + lf_, rtol=1e-5, atol=1e-5)

    # Non-lane-aligned shape exercises the JAX tail path (no pad copy).
    pr_odd = jax.random.normal(k3, (3, 5, 7, 11), dtype=jnp.float32)
    pf_odd = jax.random.normal(k4, (3, 5, 7, 11), dtype=jnp.float32)
    loss_odd = jax.block_until_ready(discriminator_loss(pr_odd, pf_odd))
    ref_odd = jnp.mean((pr_odd - 1.0) ** 2) + jnp.mean(pf_odd ** 2)
    assert jnp.allclose(loss_odd, ref_odd, rtol=1e-5, atol=1e-5), (loss_odd,
                                                                   ref_odd)

    # Multi-step grid with a partial last block (last-step-only row mask).
    pr_ms = jax.random.normal(k1, (2, 4, 40, 16), dtype=jnp.float32)
    pf_ms = jax.random.normal(k2, (2, 4, 40, 16), dtype=jnp.float32)
    loss_ms = jax.block_until_ready(discriminator_loss(pr_ms, pf_ms, tm=16))
    ref_ms = jnp.mean((pr_ms - 1.0) ** 2) + jnp.mean(pf_ms ** 2)
    assert jnp.allclose(loss_ms, ref_ms, rtol=1e-5, atol=1e-5), (loss_ms,
                                                                 ref_ms)

    # Multi-step bf16 streaming (cast happens on the VPU in-kernel).
    pr_bf = jax.random.normal(k3, (2, 4, 32, 32), dtype=jnp.bfloat16)
    pf_bf = jax.random.normal(k4, (2, 4, 32, 32), dtype=jnp.bfloat16)
    loss_bf = jax.block_until_ready(discriminator_loss(pr_bf, pf_bf, tm=8))
    ref_bf = (jnp.mean((pr_bf.astype(jnp.float32) - 1.0) ** 2)
              + jnp.mean(pf_bf.astype(jnp.float32) ** 2))
    assert jnp.allclose(loss_bf, ref_bf, rtol=1e-3, atol=1e-3), (loss_bf,
                                                                 ref_bf)

    # Tiny input (< 128 elements) falls back to the pure-JAX tail path.
    pr_tiny = jax.random.normal(k1, (2, 4, 3, 3), dtype=jnp.float32)
    pf_tiny = jax.random.normal(k2, (2, 4, 3, 3), dtype=jnp.float32)
    loss_tiny = jax.block_until_ready(discriminator_loss(pr_tiny, pf_tiny))
    ref_tiny = jnp.mean((pr_tiny - 1.0) ** 2) + jnp.mean(pf_tiny ** 2)
    assert jnp.allclose(loss_tiny, ref_tiny, rtol=1e-5, atol=1e-5)

    print("KERNEL_OK")
</pallas_src>

<mosaic_0001>
module attributes {stable_mosaic.version = 11 : i64} {
  func.func @_disc_sums_kernel(%arg0: i32, %arg1: memref<16x128xf32, #tpu.memory_space<vmem>>, %arg2: memref<16x128xf32, #tpu.memory_space<vmem>>, %arg3: memref<1x1xf32, #tpu.memory_space<smem>>, %arg4: memref<1x1xf32, #tpu.memory_space<smem>>, %arg5: memref<8x128xf32, #tpu.memory_space<vmem>>, %arg6: memref<8x128xf32, #tpu.memory_space<vmem>>) attributes {dimension_semantics = [#tpu.dimension_semantics<arbitrary>], iteration_bounds = array<i64: 1>, scalar_prefetch = 0 : i64, scratch_operands = 2 : i64, tpu.core_type = #tpu.core_type<tc>, window_params = [{transform_indices = @transform_0, window_bounds = array<i64: 16, 128>}, {transform_indices = @transform_1, window_bounds = array<i64: 16, 128>}, {transform_indices = @transform_2, window_bounds = array<i64: 1, 1>}, {transform_indices = @transform_3, window_bounds = array<i64: 1, 1>}]} {
    %c0_i32 = arith.constant 0 : i32
    %0 = arith.cmpi eq, %arg0, %c0_i32 : i32
    %1 = arith.extui %0 : i1 to i32
    %c0_i32_0 = arith.constant 0 : i32
    %2 = arith.cmpi ne, %1, %c0_i32_0 : i32
    scf.if %2 {
      %cst_16 = arith.constant 0.000000e+00 : f32
      %22 = vector.broadcast %cst_16 : f32 to vector<8x128xf32>
      %c0_17 = arith.constant 0 : index
      %c0_18 = arith.constant 0 : index
      %23 = vector.load %arg5[%c0_17, %c0_18] : memref<8x128xf32, #tpu.memory_space<vmem>>, vector<8x128xf32>
      tpu.vector_store %arg5[%c0_17, %c0_18], %22 {strides = array<i32>} : memref<8x128xf32, #tpu.memory_space<vmem>>, vector<8x128xf32>,
      %cst_19 = arith.constant 0.000000e+00 : f32
      %24 = vector.broadcast %cst_19 : f32 to vector<8x128xf32>
      %c0_20 = arith.constant 0 : index
      %c0_21 = arith.constant 0 : index
      %25 = vector.load %arg6[%c0_20, %c0_21] : memref<8x128xf32, #tpu.memory_space<vmem>>, vector<8x128xf32>
      tpu.vector_store %arg6[%c0_20, %c0_21], %24 {strides = array<i32>} : memref<8x128xf32, #tpu.memory_space<vmem>>, vector<8x128xf32>,
    } else {
    }
    %c0 = arith.constant 0 : index
    %c0_1 = arith.constant 0 : index
    %3 = vector.load %arg1[%c0, %c0_1] : memref<16x128xf32, #tpu.memory_space<vmem>>, vector<16x128xf32>
    %c0_2 = arith.constant 0 : index
    %c0_3 = arith.constant 0 : index
    %4 = vector.load %arg2[%c0_2, %c0_3] : memref<16x128xf32, #tpu.memory_space<vmem>>, vector<16x128xf32>
    %cst = arith.constant 1.000000e+00 : f32
    %5 = vector.broadcast %cst : f32 to vector<16x128xf32>
    %6 = arith.subf %3, %5 : vector<16x128xf32>
    %7 = arith.mulf %6, %6 : vector<16x128xf32>
    %8 = arith.mulf %4, %4 : vector<16x128xf32>
    %9 = vector.shape_cast %7 : vector<16x128xf32> to vector<2x8x128xf32>
    %cst_4 = arith.constant dense<0.000000e+00> : vector<8x128xf32>
    %10 = vector.multi_reduction <add>, %9, %cst_4 [0] : vector<2x8x128xf32> to vector<8x128xf32>
    %11 = vector.shape_cast %8 : vector<16x128xf32> to vector<2x8x128xf32>
    %cst_5 = arith.constant dense<0.000000e+00> : vector<8x128xf32>
    %12 = vector.multi_reduction <add>, %11, %cst_5 [0] : vector<2x8x128xf32> to vector<8x128xf32>
    %c0_6 = arith.constant 0 : index
    %c0_7 = arith.constant 0 : index
    %13 = vector.load %arg5[%c0_6, %c0_7] : memref<8x128xf32, #tpu.memory_space<vmem>>, vector<8x128xf32>
    %14 = arith.addf %13, %10 : vector<8x128xf32>
    %c0_8 = arith.constant 0 : index
    %c0_9 = arith.constant 0 : index
    %15 = vector.load %arg5[%c0_8, %c0_9] : memref<8x128xf32, #tpu.memory_space<vmem>>, vector<8x128xf32>
    tpu.vector_store %arg5[%c0_8, %c0_9], %14 {strides = array<i32>} : memref<8x128xf32, #tpu.memory_space<vmem>>, vector<8x128xf32>,
    %c0_10 = arith.constant 0 : index
    %c0_11 = arith.constant 0 : index
    %16 = vector.load %arg6[%c0_10, %c0_11] : memref<8x128xf32, #tpu.memory_space<vmem>>, vector<8x128xf32>
    %17 = arith.addf %16, %12 : vector<8x128xf32>
    %c0_12 = arith.constant 0 : index
    %c0_13 = arith.constant 0 : index
    %18 = vector.load %arg6[%c0_12, %c0_13] : memref<8x128xf32, #tpu.memory_space<vmem>>, vector<8x128xf32>
    tpu.vector_store %arg6[%c0_12, %c0_13], %17 {strides = array<i32>} : memref<8x128xf32, #tpu.memory_space<vmem>>, vector<8x128xf32>,
    %c0_i32_14 = arith.constant 0 : i32
    %19 = arith.cmpi eq, %arg0, %c0_i32_14 : i32
    %20 = arith.extui %19 : i1 to i32
    %c0_i32_15 = arith.constant 0 : i32
    %21 = arith.cmpi ne, %20, %c0_i32_15 : i32
    scf.if %21 {
      %c0_16 = arith.constant 0 : index
      %c0_17 = arith.constant 0 : index
      %22 = vector.load %arg5[%c0_16, %c0_17] : memref<8x128xf32, #tpu.memory_space<vmem>>, vector<8x128xf32>
      %23 = vector.shape_cast %22 : vector<8x128xf32> to vector<1x8x128xf32>
      %cst_18 = arith.constant dense<0.000000e+00> : vector<1xf32>
      %24 = vector.multi_reduction <add>, %23, %cst_18 [1, 2] : vector<1x8x128xf32> to vector<1xf32>
      %25 = vector.shape_cast %24 : vector<1xf32> to vector<1x1x1xf32>
      %26 = vector.extract %25[0, 0, 0] : f32 from vector<1x1x1xf32>
      %c0_19 = arith.constant 0 : index
      %c0_20 = arith.constant 0 : index
      %27 = memref.load %arg3[%c0_19, %c0_20] : memref<1x1xf32, #tpu.memory_space<smem>>
      memref.store %26, %arg3[%c0_19, %c0_20] : memref<1x1xf32, #tpu.memory_space<smem>>
      %c0_21 = arith.constant 0 : index
      %c0_22 = arith.constant 0 : index
      %28 = vector.load %arg6[%c0_21, %c0_22] : memref<8x128xf32, #tpu.memory_space<vmem>>, vector<8x128xf32>
      %29 = vector.shape_cast %28 : vector<8x128xf32> to vector<1x8x128xf32>
      %cst_23 = arith.constant dense<0.000000e+00> : vector<1xf32>
      %30 = vector.multi_reduction <add>, %29, %cst_23 [1, 2] : vector<1x8x128xf32> to vector<1xf32>
      %31 = vector.shape_cast %30 : vector<1xf32> to vector<1x1x1xf32>
      %32 = vector.extract %31[0, 0, 0] : f32 from vector<1x1x1xf32>
      %c0_24 = arith.constant 0 : index
      %c0_25 = arith.constant 0 : index
      %33 = memref.load %arg4[%c0_24, %c0_25] : memref<1x1xf32, #tpu.memory_space<smem>>
      memref.store %32, %arg4[%c0_24, %c0_25] : memref<1x1xf32, #tpu.memory_space<smem>>
    } else {
    }
    return
  }
  func.func @transform_0(%arg0: i32) -> (i32, i32) {
    %c0_i32 = arith.constant 0 : i32
    %c0_i32_0 = arith.constant 0 : i32
    return %arg0, %c0_i32 : i32, i32
  }
  func.func @transform_1(%arg0: i32) -> (i32, i32) {
    %c0_i32 = arith.constant 0 : i32
    %c0_i32_0 = arith.constant 0 : i32
    return %arg0, %c0_i32 : i32, i32
  }
  func.func @transform_2(%arg0: i32) -> (i32, i32) {
    %c0_i32 = arith.constant 0 : i32
    %c0_i32_0 = arith.constant 0 : i32
    %c0_i32_1 = arith.constant 0 : i32
    return %c0_i32, %c0_i32_0 : i32, i32
  }
  func.func @transform_3(%arg0: i32) -> (i32, i32) {
    %c0_i32 = arith.constant 0 : i32
    %c0_i32_0 = arith.constant 0 : i32
    %c0_i32_1 = arith.constant 0 : i32
    return %c0_i32, %c0_i32_0 : i32, i32
  }
}

</mosaic_0001>

<llo_original>
// kernel: tpu_custom_call.1
$region0: #{tpu_custom_call.1}
  #allocation0 [shape = 'u32[]', space=smem, size = 0x4, offset = 0x4, fixed_abs, tag = 'smem constant byte address 0x4 - core index']
  #allocation1 [shape = 'u32[144,128]{1,0:T(1,128)}', space=vmem, size = 0x12000, scoped, tag = 'internal scratch']
  #allocation2 [shape = 'f32[8,128]{1,0:T(8,128)}', space=vmem, size = 0x1000, scoped, tag = 'scratch operand']
  #allocation3 [shape = 'f32[8,128]{1,0:T(8,128)}', space=vmem, size = 0x1000, scoped, tag = 'scratch operand']
  %s0 = inlined_call_operand.hbm [shape: f32[16,128], index: 0, kind: input, shape index: {}]
  %s1 = inlined_call_operand.hbm [shape: f32[16,128], index: 1, kind: input, shape index: {}]
  %s2 = inlined_call_operand.hbm [shape: f32[1,1], index: 2, kind: output, shape index: {0}]
  %s3 = inlined_call_operand.hbm [shape: f32[1,1], index: 3, kind: output, shape index: {1}]
  %4 = xla_tuple %s2, %s3
  %s5 = sld [smem:[#allocation0]]
  $region42: #{tpu_custom_call.1} parent=0
    _
  %s7 = ssub.s32 1, %s5
  %s8 = scalar_select 0, %s7, %s5
  $region1: #{tpu_custom_call.1} parent=0
    #allocation4 [shape = 'u8[8192]{0}', space=vmem, size = 0x2000, scoped, tag = 'input window, operand 0, single buffered']
    #allocation5 [shape = 's32[1]{0}', space=sflag, size = 0x4, scoped, tag = 'scoped memory for tpu_custom_call.1']
    #allocation6 [shape = 's32[1]{0}', space=sflag, size = 0x4, scoped, tag = 'scoped memory for tpu_custom_call.1']
    #allocation7 [shape = 'u8[8192]{0}', space=vmem, size = 0x2000, scoped, tag = 'input window, operand 1, single buffered']
    #allocation8 [shape = 's32[1]{0}', space=sflag, size = 0x4, scoped, tag = 'scoped memory for tpu_custom_call.1']
    #allocation9 [shape = 'u8[512]{0}', space=smem, size = 0x200, scoped, tag = 'output window, operand 0, single buffered']
    #allocation10 [shape = 'u8[512]{0}', space=smem, size = 0x200, scoped, tag = 'output window, operand 1, single buffered']
    #allocation11 [shape = 's32[1]{0}', space=sflag, size = 0x4, scoped, tag = 'scoped memory for tpu_custom_call.1']
    %9 = vsyncpa [#allocation5], 0
    %10 = vsyncpa [#allocation8], 0
    %11 = vsyncpa [#allocation6], 0
    %12 = vsyncpa [#allocation11], 0
    // Predicated region
    $region2: #{tpu_custom_call.1} parent=1 // pred_check
      _
    $region3: #{tpu_custom_call.1} parent=1 // pred_check_branch
      %14 = sbr.rel (0) target = $region5
    $region4: #{tpu_custom_call.1} parent=1 // pred_region
      %s16 = ssub.s32 256, 256
      %17 = vsyncadd [#allocation5], %s16
      %s18 = sshll.u32 [#allocation4], 4
      %s19 = int_to_ptr.vmem [resolvable:$true] %s18
      %24 = dma.hbm_to_vmem [thread:$0]  %s0, 256, %s19, [#allocation5], 128, 128, 8
    $region5: #{tpu_custom_call.1} parent=1 // pred_fallthru
      _
    // Predicated region
    $region6: #{tpu_custom_call.1} parent=1 // pred_check
      _
    $region7: #{tpu_custom_call.1} parent=1 // pred_check_branch
      %26 = sbr.rel (0) target = $region9
    $region8: #{tpu_custom_call.1} parent=1 // pred_region
      %s28 = ssub.s32 256, 256
      %29 = vsyncadd [#allocation8], %s28
      %s30 = sshll.u32 [#allocation7], 4
      %s31 = int_to_ptr.vmem [resolvable:$true] %s30
      %36 = dma.hbm_to_vmem [thread:$0]  %s1, 256, %s31, [#allocation8], 128, 128, 8
    $region9: #{tpu_custom_call.1} parent=1 // pred_fallthru
      _
    // Predicated region
    $region10: #{tpu_custom_call.1} parent=1 // pred_check
      _
    $region11: #{tpu_custom_call.1} parent=1 // pred_check_branch
      %38 = sbr.rel (0) target = $region13
    $region12: #{tpu_custom_call.1} parent=1 // pred_region
      %39 = dma.done [#allocation5], 256
    $region13: #{tpu_custom_call.1} parent=1 // pred_fallthru
      _
    // Predicated region
    $region14: #{tpu_custom_call.1} parent=1 // pred_check
      _
    $region15: #{tpu_custom_call.1} parent=1 // pred_check_branch
      %41 = sbr.rel (0) target = $region17
    $region16: #{tpu_custom_call.1} parent=1 // pred_region
      %42 = dma.done [#allocation8], 256
    $region17: #{tpu_custom_call.1} parent=1 // pred_fallthru
      _
    %p43 = scmp.eq.s32.totalorder 0, 0
    // Predicated region
    $region18: #{tpu_custom_call.1} parent=1 // pred_check
      %p44 = pneg %p43
    $region19: #{tpu_custom_call.1} parent=1 // pred_check_branch
      %46 = sbr.rel (%p44) target = $region21
    $region20: #{tpu_custom_call.1} parent=1 // pred_region
      %47 = vst [vmem:[#allocation2] sm:$0xff] 0.0
      %48 = vst [vmem:[#allocation3] sm:$0xff] 0.0
    $region21: #{tpu_custom_call.1} parent=1 // pred_fallthru
      _
    %v49 = vld [vmem:[#allocation4] sm:$0xff]
    %v50 = vld [vmem:[#allocation4 + $0x8] sm:$0xff]
    %v51 = vld [vmem:[#allocation7] sm:$0xff]
    %v52 = vld [vmem:[#allocation7 + $0x8] sm:$0xff]
    %v53 = vsub.f32 %v49, 1.0
    %v54 = vsub.f32 %v50, 1.0
    %v55 = vmul.f32 %v53, %v53
    %v56 = vmul.f32 %v54, %v54
    %v57 = vmul.f32 %v51, %v51
    %v58 = vmul.f32 %v52, %v52
    %v59 = vadd.f32 %v55, %v56
    %v60 = vadd.f32 %v57, %v58
    %v61 = vld [vmem:[#allocation2] sm:$0xff]
    %v62 = vadd.f32 %v61, %v59
    %63 = vst [vmem:[#allocation2] sm:$0xff] %v62
    %v64 = vld [vmem:[#allocation3] sm:$0xff]
    %v65 = vadd.f32 %v64, %v60
    %66 = vst [vmem:[#allocation3] sm:$0xff] %v65
    // Predicated region
    $region22: #{tpu_custom_call.1} parent=1 // pred_check
      %p67 = pneg %p43
    $region23: #{tpu_custom_call.1} parent=1 // pred_check_branch
      %69 = sbr.rel (%p67) target = $region25
    $region24: #{tpu_custom_call.1} parent=1 // pred_region
      %v70 = vld [vmem:[#allocation2] sm:$0xff]
      %71 = vadd.xlane.f32.xlu0 %v70
      %v72 = vpop.xlane.xlu0 %71
      %v73 = vrot.slane %v72, 4
      %v74 = vadd.f32 %v72, %v73
      %v75 = vrot.slane %v74, 2
      %v76 = vadd.f32 %v74, %v75
      %v77 = vrot.slane %v76, 1
      %v78 = vadd.f32 %v76, %v77
      %s79 = vtos %v78
      %s80 = scalar_lea.smem [#allocation9], 0
      %81 = sst [smem:[%s80]] %s79
      %v82 = vld [vmem:[#allocation3] sm:$0xff]
      %83 = vadd.xlane.f32.xlu0 %v82
      %v84 = vpop.xlane.xlu0 %83
      %v85 = vrot.slane %v84, 4
      %v86 = vadd.f32 %v84, %v85
      %v87 = vrot.slane %v86, 2
      %v88 = vadd.f32 %v86, %v87
      %v89 = vrot.slane %v88, 1
      %v90 = vadd.f32 %v88, %v89
      %s91 = vtos %v90
      %s92 = scalar_lea.smem [#allocation10], 0
      %93 = sst [smem:[%s92]] %s91
    $region25: #{tpu_custom_call.1} parent=1 // pred_fallthru
      _
    // Predicated region
    $region26: #{tpu_custom_call.1} parent=1 // pred_check
      _
    $region27: #{tpu_custom_call.1} parent=1 // pred_check_branch
      %95 = sbr.rel (0) target = $region29
    $region28: #{tpu_custom_call.1} parent=1 // pred_region
      %s97 = ssub.s32 16, 16
      %98 = vsyncadd [#allocation6], %s97
      %101 = dma.smem_to_hbm [#allocation9], 16, %s2, [#allocation6]
    $region29: #{tpu_custom_call.1} parent=1 // pred_fallthru
      _
    // Predicated region
    $region30: #{tpu_custom_call.1} parent=1 // pred_check
      _
    $region31: #{tpu_custom_call.1} parent=1 // pred_check_branch
      %103 = sbr.rel (0) target = $region33
    $region32: #{tpu_custom_call.1} parent=1 // pred_region
      %s105 = ssub.s32 16, 16
      %106 = vsyncadd [#allocation11], %s105
      %109 = dma.smem_to_hbm [#allocation10], 16, %s3, [#allocation11]
    $region33: #{tpu_custom_call.1} parent=1 // pred_fallthru
      _
    // Predicated region
    $region34: #{tpu_custom_call.1} parent=1 // pred_check
      _
    $region35: #{tpu_custom_call.1} parent=1 // pred_check_branch
      %111 = sbr.rel (0) target = $region37
    $region36: #{tpu_custom_call.1} parent=1 // pred_region
      %112 = dma.done [#allocation6], 16
    $region37: #{tpu_custom_call.1} parent=1 // pred_fallthru
      _
    // Predicated region
    $region38: #{tpu_custom_call.1} parent=1 // pred_check
      _
    $region39: #{tpu_custom_call.1} parent=1 // pred_check_branch
      %114 = sbr.rel (0) target = $region41
    $region40: #{tpu_custom_call.1} parent=1 // pred_region
      %115 = dma.done [#allocation11], 16
    $region41: #{tpu_custom_call.1} parent=1 // pred_fallthru
      _
    %116 = sfence
    %117 = vsyncpa [#allocation5], 1
    %118 = vsyncpa [#allocation8], 1
    %119 = vsyncpa [#allocation6], 1
    %120 = vsyncpa [#allocation11], 1

</llo_original>
